<compile_context>
chip_gen: v7x
topology: tpu7x:2x2x1
jax: 0.10.0
libtpu: 0.0.40
codegen_flags: <defaults>
</compile_context>

<pallas_src>
import functools

import jax
import jax.numpy as jnp
from jax.experimental import pallas as pl
from jax.experimental.pallas import tpu as pltpu

LANES = 128
MAX_TILE_ROWS = 4096   # (4096, 128) f32 block = 2 MiB per input per buffer


def _num_tensorcores():
    """2 on multi-TensorCore chips (v4/v5p megacore, v7x), else 1."""
    try:
        kind = jax.devices()[0].device_kind.lower()
    except Exception:
        return 1
    if any(tag in kind for tag in ("v7", "v5p", "v4")):
        return 2
    return 1


def _row_align(*dtypes):
    """Second-minor block alignment for the narrowest streamed dtype."""
    itemsize = min(jnp.dtype(d).itemsize for d in dtypes)
    return max(8, 32 // itemsize)   # f32 -> 8, bf16 -> 16, 8-bit -> 32


def _focal_sum_f32(x, t, gamma):
    """Unscaled (no alpha, no mean) focal-loss sum in f32 — tail / fallback."""
    x = x.astype(jnp.float32)
    t = t.astype(jnp.float32)
    bce = jnp.maximum(x, 0.0) - x * t + jnp.log1p(jnp.exp(-jnp.abs(x)))
    pt = jnp.exp(-bce)
    return jnp.sum((1.0 - pt) ** gamma * bce)


def _focal_loss_kernel(x_ref, t_ref, out_ref, acc_ref, *,
                       gamma, rows, steps, tile_rows, first_masked):
    c = pl.program_id(0)   # core / partial-sum index ("parallel")
    j = pl.program_id(1)   # tile index within this core's range ("arbitrary")

    @pl.when(j == 0)
    def _():
        acc_ref[...] = jnp.zeros_like(acc_ref)

    x = x_ref[...].astype(jnp.float32)
    t = t_ref[...].astype(jnp.float32)

    # Numerically-stable BCE with logits (matches torch BCEWithLogitsLoss).
    bce = jnp.maximum(x, 0.0) - x * t + jnp.log1p(jnp.exp(-jnp.abs(x)))
    pt = jnp.exp(-bce)
    q = 1.0 - pt   # bce >= 0 -> pt <= 1 -> q >= 0 (no clamp needed here)

    if gamma == int(gamma) and gamma >= 0:
        ig = int(gamma)
        if ig == 0:
            w = jnp.ones_like(q)
        else:
            w = q
            for _ in range(ig - 1):     # integer power -> multiply chain (VPU)
                w = w * q
    else:
        w = jnp.maximum(q, 0.0) ** gamma   # non-integer gamma fallback (EUP)

    # alpha is folded into the wrapper: keep the per-element VALU work minimal.
    f_loss = w * bce

    # Global tile index for this grid step.
    g = c * steps + j

    # Steady state: tile fully in-bounds -> unmasked vreg-aligned accumulate.
    @pl.when(g < first_masked)
    def _():
        acc_ref[...] += f_loss.reshape(-1, 8, LANES).sum(axis=0)

    # Ragged / duplicated (phantom) tail tiles: mask rows past `rows`.
    @pl.when(g >= first_masked)
    def _():
        row_ids = jax.lax.broadcasted_iota(jnp.int32, (tile_rows, LANES), 0)
        valid = (g * tile_rows + row_ids) < rows
        masked = jnp.where(valid, f_loss, 0.0)
        acc_ref[...] += masked.reshape(-1, 8, LANES).sum(axis=0)

    # Per-core epilogue: single-vreg XLU reduce of the accumulator.
    @pl.when(j == pl.num_programs(1) - 1)
    def _():
        out_ref[0, 0] = jnp.sum(acc_ref[...])


def focal_loss(inputs, targets, alpha=10.0, gamma=2.0):
    """Focal loss over arbitrary-shaped logits/targets (elementwise + mean)."""
    alpha = float(alpha)
    gamma = float(gamma)
    n_valid = int(inputs.size)

    flat_x = inputs.reshape(-1)
    flat_t = targets.reshape(-1)

    rows = n_valid // LANES
    rem = n_valid - rows * LANES
    align = _row_align(inputs.dtype, targets.dtype)

    # Tiny (or empty) inputs: a kernel launch is pure overhead.
    # (Empty input -> 0/0 -> NaN, matching torch.mean of an empty tensor.)
    if rows < align:
        total = _focal_sum_f32(flat_x, flat_t, gamma)
        return total * jnp.float32(alpha) / jnp.float32(n_valid)

    # Main region: first rows*128 elements, handled by the kernel.  The <=127
    # element ragged tail is summed in plain JAX (no jnp.pad copy pass).
    # TODO(synk): a fully zero-copy ragged path would need manual DMA from the
    # unsliced flat buffer; the main-region slice below still copies when
    # rem != 0 (it is a no-op reshape when the size is a multiple of 128).
    n_main = rows * LANES
    x_main = flat_x[:n_main] if rem else flat_x
    t_main = flat_t[:n_main] if rem else flat_t
    x2 = x_main.reshape(rows, LANES)
    t2 = t_main.reshape(rows, LANES)

    # Tile rows: as large as possible, vreg/dtype aligned, never exceeding rows
    # (so only standard within-bounds partial final blocks occur).
    tile_rows = min(MAX_TILE_ROWS, (rows // align) * align)
    num_tiles = -(-rows // tile_rows)            # cdiv
    num_cores = _num_tensorcores()
    steps = -(-num_tiles // num_cores)           # tiles per core
    last_block = num_tiles - 1
    # First global tile index that can contain invalid (out-of-range /
    # duplicated) rows; everything before it takes the unmasked fast path.
    first_masked = rows // tile_rows

    def in_map(c, j):
        g = c * steps + j
        # Beyond-the-end (phantom) tiles re-read the last valid block; their
        # contribution is fully masked in the kernel.
        return (jnp.minimum(g, last_block), 0)

    kernel = functools.partial(
        _focal_loss_kernel,
        gamma=gamma,
        rows=rows,
        steps=steps,
        tile_rows=tile_rows,
        first_masked=first_masked,
    )

    partials = pl.pallas_call(
        kernel,
        out_shape=jax.ShapeDtypeStruct((num_cores, 1), jnp.float32),
        grid_spec=pltpu.PrefetchScalarGridSpec(
            num_scalar_prefetch=0,
            grid=(num_cores, steps),
            in_specs=[
                pl.BlockSpec((tile_rows, LANES), in_map),
                pl.BlockSpec((tile_rows, LANES), in_map),
            ],
            out_specs=pl.BlockSpec(
                (1, 1), lambda c, j: (c, 0), memory_space=pltpu.SMEM
            ),
            scratch_shapes=[pltpu.VMEM((8, LANES), jnp.float32)],
        ),
        compiler_params=pltpu.CompilerParams(
            dimension_semantics=("parallel", "arbitrary"),
            vmem_limit_bytes=32 << 20,
        ),
    )(x2, t2)

    total = jnp.sum(partials)
    if rem:
        total = total + _focal_sum_f32(flat_x[n_main:], flat_t[n_main:], gamma)
    return total * (jnp.float32(alpha) / jnp.float32(n_valid))


def _focal_loss_ref(inputs, targets, alpha=10.0, gamma=2.0):
    x = inputs.astype(jnp.float32)
    t = targets.astype(jnp.float32)
    bce = jnp.maximum(x, 0.0) - x * t + jnp.log1p(jnp.exp(-jnp.abs(x)))
    pt = jnp.exp(-bce)
    return jnp.mean(alpha * (1.0 - pt) ** gamma * bce)


if __name__ == "__main__":
    key = jax.random.PRNGKey(0)
    k1, k2 = jax.random.split(key)
    # NCHW logits and binary targets, as BCEWithLogitsLoss expects.
    inputs = jax.random.normal(k1, (2, 4, 16, 16), dtype=jnp.float32)
    targets = (jax.random.uniform(k2, (2, 4, 16, 16)) > 0.5).astype(jnp.float32)

    loss = focal_loss(inputs, targets, alpha=10.0, gamma=2.0)
    loss = jax.block_until_ready(loss)
    ref = _focal_loss_ref(inputs, targets, alpha=10.0, gamma=2.0)
    assert jnp.allclose(loss, ref, rtol=1e-5, atol=1e-5), (loss, ref)

    # Ragged size: exercises the masked partial tile and the JAX tail path.
    k3, k4 = jax.random.split(k1)
    xr = jax.random.normal(k3, (3, 5, 7, 11), dtype=jnp.float32)
    tr = (jax.random.uniform(k4, (3, 5, 7, 11)) > 0.5).astype(jnp.float32)
    loss_r = jax.block_until_ready(focal_loss(xr, tr, alpha=10.0, gamma=2.0))
    ref_r = _focal_loss_ref(xr, tr, alpha=10.0, gamma=2.0)
    assert jnp.allclose(loss_r, ref_r, rtol=1e-5, atol=1e-5), (loss_r, ref_r)

    print("KERNEL_OK")
</pallas_src>

<mosaic_0001>
module attributes {stable_mosaic.version = 11 : i64} {
  func.func @_focal_loss_kernel(%arg0: i32, %arg1: i32, %arg2: memref<16x128xf32, #tpu.memory_space<vmem>>, %arg3: memref<16x128xf32, #tpu.memory_space<vmem>>, %arg4: memref<1x1xf32, #tpu.memory_space<smem>>, %arg5: memref<8x128xf32, #tpu.memory_space<vmem>>) attributes {dimension_semantics = [#tpu.dimension_semantics<parallel>, #tpu.dimension_semantics<arbitrary>], iteration_bounds = array<i64: 1, 1>, scalar_prefetch = 0 : i64, scratch_operands = 1 : i64, tpu.core_type = #tpu.core_type<tc>, window_params = [{transform_indices = @transform_0, window_bounds = array<i64: 16, 128>}, {transform_indices = @transform_1, window_bounds = array<i64: 16, 128>}, {transform_indices = @transform_2, window_bounds = array<i64: 1, 1>}]} {
    %c0_i32 = arith.constant 0 : i32
    %0 = arith.cmpi eq, %arg1, %c0_i32 : i32
    %1 = arith.extui %0 : i1 to i32
    %c0_i32_0 = arith.constant 0 : i32
    %2 = arith.cmpi ne, %1, %c0_i32_0 : i32
    scf.if %2 {
      %cst_13 = arith.constant 0.000000e+00 : f32
      %33 = vector.broadcast %cst_13 : f32 to vector<8x128xf32>
      %c0_14 = arith.constant 0 : index
      %c0_15 = arith.constant 0 : index
      %34 = vector.load %arg5[%c0_14, %c0_15] : memref<8x128xf32, #tpu.memory_space<vmem>>, vector<8x128xf32>
      tpu.vector_store %arg5[%c0_14, %c0_15], %33 {strides = array<i32>} : memref<8x128xf32, #tpu.memory_space<vmem>>, vector<8x128xf32>,
    } else {
    }
    %c0 = arith.constant 0 : index
    %c0_1 = arith.constant 0 : index
    %3 = vector.load %arg2[%c0, %c0_1] : memref<16x128xf32, #tpu.memory_space<vmem>>, vector<16x128xf32>
    %c0_2 = arith.constant 0 : index
    %c0_3 = arith.constant 0 : index
    %4 = vector.load %arg3[%c0_2, %c0_3] : memref<16x128xf32, #tpu.memory_space<vmem>>, vector<16x128xf32>
    %cst = arith.constant 0.000000e+00 : f32
    %5 = vector.broadcast %cst : f32 to vector<16x128xf32>
    %6 = arith.maximumf %3, %5 : vector<16x128xf32>
    %7 = arith.mulf %3, %4 : vector<16x128xf32>
    %8 = arith.subf %6, %7 : vector<16x128xf32>
    %9 = math.absf %3 : vector<16x128xf32>
    %cst_4 = arith.constant 0.000000e+00 : f32
    %10 = vector.broadcast %cst_4 : f32 to vector<16x128xf32>
    %11 = arith.subf %10, %9 : vector<16x128xf32>
    %12 = math.exp %11 : vector<16x128xf32>
    %13 = math.log1p %12 : vector<16x128xf32>
    %14 = arith.addf %8, %13 : vector<16x128xf32>
    %cst_5 = arith.constant 0.000000e+00 : f32
    %15 = vector.broadcast %cst_5 : f32 to vector<16x128xf32>
    %16 = arith.subf %15, %14 : vector<16x128xf32>
    %17 = math.exp %16 : vector<16x128xf32>
    %cst_6 = arith.constant 1.000000e+00 : f32
    %18 = vector.broadcast %cst_6 : f32 to vector<16x128xf32>
    %19 = arith.subf %18, %17 : vector<16x128xf32>
    %20 = arith.mulf %19, %19 : vector<16x128xf32>
    %21 = arith.mulf %20, %14 : vector<16x128xf32>
    %c1_i32 = arith.constant 1 : i32
    %22 = arith.muli %arg0, %c1_i32 : i32
    %23 = arith.addi %22, %arg1 : i32
    %c1_i32_7 = arith.constant 1 : i32
    %24 = arith.cmpi slt, %23, %c1_i32_7 : i32
    %25 = arith.extui %24 : i1 to i32
    %c0_i32_8 = arith.constant 0 : i32
    %26 = arith.cmpi ne, %25, %c0_i32_8 : i32
    scf.if %26 {
      %c0_13 = arith.constant 0 : index
      %c0_14 = arith.constant 0 : index
      %33 = vector.load %arg5[%c0_13, %c0_14] : memref<8x128xf32, #tpu.memory_space<vmem>>, vector<8x128xf32>
      %34 = vector.shape_cast %21 : vector<16x128xf32> to vector<2x8x128xf32>
      %cst_15 = arith.constant dense<0.000000e+00> : vector<8x128xf32>
      %35 = vector.multi_reduction <add>, %34, %cst_15 [0] : vector<2x8x128xf32> to vector<8x128xf32>
      %36 = arith.addf %33, %35 : vector<8x128xf32>
      %c0_16 = arith.constant 0 : index
      %c0_17 = arith.constant 0 : index
      %37 = vector.load %arg5[%c0_16, %c0_17] : memref<8x128xf32, #tpu.memory_space<vmem>>, vector<8x128xf32>
      tpu.vector_store %arg5[%c0_16, %c0_17], %36 {strides = array<i32>} : memref<8x128xf32, #tpu.memory_space<vmem>>, vector<8x128xf32>,
    } else {
    }
    %c1_i32_9 = arith.constant 1 : i32
    %27 = arith.cmpi sge, %23, %c1_i32_9 : i32
    %28 = arith.extui %27 : i1 to i32
    %c0_i32_10 = arith.constant 0 : i32
    %29 = arith.cmpi ne, %28, %c0_i32_10 : i32
    scf.if %29 {
      %33 = tpu.iota {dimensions = array<i32: 0>} : vector<16x128xi32>
      %c16_i32 = arith.constant 16 : i32
      %34 = arith.muli %23, %c16_i32 : i32
      %35 = vector.broadcast %34 : i32 to vector<16x128xi32>
      %36 = arith.addi %35, %33 : vector<16x128xi32>
      %c16_i32_13 = arith.constant 16 : i32
      %37 = vector.broadcast %c16_i32_13 : i32 to vector<16x128xi32>
      %38 = arith.cmpi slt, %36, %37 : vector<16x128xi32>
      %cst_14 = arith.constant 0.000000e+00 : f32
      %39 = vector.broadcast %cst_14 : f32 to vector<16x128xf32>
      %40 = arith.select %38, %21, %39 : vector<16x128xi1>, vector<16x128xf32>
      %c0_15 = arith.constant 0 : index
      %c0_16 = arith.constant 0 : index
      %41 = vector.load %arg5[%c0_15, %c0_16] : memref<8x128xf32, #tpu.memory_space<vmem>>, vector<8x128xf32>
      %42 = vector.shape_cast %40 : vector<16x128xf32> to vector<2x8x128xf32>
      %cst_17 = arith.constant dense<0.000000e+00> : vector<8x128xf32>
      %43 = vector.multi_reduction <add>, %42, %cst_17 [0] : vector<2x8x128xf32> to vector<8x128xf32>
      %44 = arith.addf %41, %43 : vector<8x128xf32>
      %c0_18 = arith.constant 0 : index
      %c0_19 = arith.constant 0 : index
      %45 = vector.load %arg5[%c0_18, %c0_19] : memref<8x128xf32, #tpu.memory_space<vmem>>, vector<8x128xf32>
      tpu.vector_store %arg5[%c0_18, %c0_19], %44 {strides = array<i32>} : memref<8x128xf32, #tpu.memory_space<vmem>>, vector<8x128xf32>,
    } else {
    }
    %c0_i32_11 = arith.constant 0 : i32
    %30 = arith.cmpi eq, %arg1, %c0_i32_11 : i32
    %31 = arith.extui %30 : i1 to i32
    %c0_i32_12 = arith.constant 0 : i32
    %32 = arith.cmpi ne, %31, %c0_i32_12 : i32
    scf.if %32 {
      %c0_13 = arith.constant 0 : index
      %c0_14 = arith.constant 0 : index
      %33 = vector.load %arg5[%c0_13, %c0_14] : memref<8x128xf32, #tpu.memory_space<vmem>>, vector<8x128xf32>
      %34 = vector.shape_cast %33 : vector<8x128xf32> to vector<1x8x128xf32>
      %cst_15 = arith.constant dense<0.000000e+00> : vector<1xf32>
      %35 = vector.multi_reduction <add>, %34, %cst_15 [1, 2] : vector<1x8x128xf32> to vector<1xf32>
      %36 = vector.shape_cast %35 : vector<1xf32> to vector<1x1x1xf32>
      %37 = vector.extract %36[0, 0, 0] : f32 from vector<1x1x1xf32>
      %c0_16 = arith.constant 0 : index
      %c0_17 = arith.constant 0 : index
      %38 = memref.load %arg4[%c0_16, %c0_17] : memref<1x1xf32, #tpu.memory_space<smem>>
      memref.store %37, %arg4[%c0_16, %c0_17] : memref<1x1xf32, #tpu.memory_space<smem>>
    } else {
    }
    return
  }
  func.func @transform_0(%arg0: i32, %arg1: i32) -> (i32, i32) {
    %c1_i32 = arith.constant 1 : i32
    %0 = arith.muli %arg0, %c1_i32 : i32
    %1 = arith.addi %0, %arg1 : i32
    %c0_i32 = arith.constant 0 : i32
    %2 = arith.minsi %1, %c0_i32 : i32
    %c0_i32_0 = arith.constant 0 : i32
    %c0_i32_1 = arith.constant 0 : i32
    return %2, %c0_i32_0 : i32, i32
  }
  func.func @transform_1(%arg0: i32, %arg1: i32) -> (i32, i32) {
    %c1_i32 = arith.constant 1 : i32
    %0 = arith.muli %arg0, %c1_i32 : i32
    %1 = arith.addi %0, %arg1 : i32
    %c0_i32 = arith.constant 0 : i32
    %2 = arith.minsi %1, %c0_i32 : i32
    %c0_i32_0 = arith.constant 0 : i32
    %c0_i32_1 = arith.constant 0 : i32
    return %2, %c0_i32_0 : i32, i32
  }
  func.func @transform_2(%arg0: i32, %arg1: i32) -> (i32, i32) {
    %c0_i32 = arith.constant 0 : i32
    %c0_i32_0 = arith.constant 0 : i32
    return %arg0, %c0_i32 : i32, i32
  }
}

</mosaic_0001>

<llo_original>
// kernel: tpu_custom_call.1
$region0: #{tpu_custom_call.1}
  #allocation0 [shape = 'u32[]', space=smem, size = 0x4, offset = 0x4, fixed_abs, tag = 'smem constant byte address 0x4 - core index']
  #allocation1 [shape = 'u32[144,128]{1,0:T(1,128)}', space=vmem, size = 0x12000, scoped, tag = 'internal scratch']
  #allocation2 [shape = 'f32[8,128]{1,0:T(8,128)}', space=vmem, size = 0x1000, scoped, tag = 'scratch operand']
  %s0 = inlined_call_operand.hbm [shape: f32[16,128], index: 0, kind: input, shape index: {}]
  %s1 = inlined_call_operand.hbm [shape: f32[16,128], index: 1, kind: input, shape index: {}]
  %s2 = inlined_call_operand.hbm [shape: f32[1,1], index: 2, kind: output, shape index: {}]
  %s3 = sld [smem:[#allocation0]]
  $region42: #{tpu_custom_call.1} parent=0
    _
  %s5 = ssub.s32 1, %s3
  %s6 = scalar_select 0, %s5, %s3
  $region1: #{tpu_custom_call.1} parent=0
    #allocation3 [shape = 'u8[8192]{0}', space=vmem, size = 0x2000, scoped, tag = 'input window, operand 0, single buffered']
    #allocation4 [shape = 's32[1]{0}', space=sflag, size = 0x4, scoped, tag = 'scoped memory for tpu_custom_call.1']
    #allocation5 [shape = 's32[1]{0}', space=sflag, size = 0x4, scoped, tag = 'scoped memory for tpu_custom_call.1']
    #allocation6 [shape = 'u8[8192]{0}', space=vmem, size = 0x2000, scoped, tag = 'input window, operand 1, single buffered']
    #allocation7 [shape = 's32[1]{0}', space=sflag, size = 0x4, scoped, tag = 'scoped memory for tpu_custom_call.1']
    #allocation8 [shape = 'u8[512]{0}', space=smem, size = 0x200, scoped, tag = 'output window, operand 0, single buffered']
    %7 = vsyncpa [#allocation4], 0
    %8 = vsyncpa [#allocation7], 0
    %9 = vsyncpa [#allocation5], 0
    // Predicated region
    $region2: #{tpu_custom_call.1} parent=1 // pred_check
      _
    $region3: #{tpu_custom_call.1} parent=1 // pred_check_branch
      %11 = sbr.rel (0) target = $region5
    $region4: #{tpu_custom_call.1} parent=1 // pred_region
      %s12 = sadd.s32 0, 0
      %p13 = scmp.lt.s32.totalorder %s12, 0
      %s14 = scalar_select %p13, %s12, 0
      %s15 = smul.u32 2, %s14
      %s17 = ssub.s32 256, 256
      %18 = vsyncadd [#allocation4], %s17
      %s19 = smul.addr %s15, 128
      %s20 = scalar_lea.hbm %s0, %s19
      %s21 = sshll.u32 [#allocation3], 4
      %s22 = int_to_ptr.vmem [resolvable:$true] %s21
      %27 = dma.hbm_to_vmem [thread:$0]  %s20, 256, %s22, [#allocation4], 128, 128, 8
    $region5: #{tpu_custom_call.1} parent=1 // pred_fallthru
      _
    // Predicated region
    $region6: #{tpu_custom_call.1} parent=1 // pred_check
      _
    $region7: #{tpu_custom_call.1} parent=1 // pred_check_branch
      %29 = sbr.rel (0) target = $region9
    $region8: #{tpu_custom_call.1} parent=1 // pred_region
      %s30 = sadd.s32 0, 0
      %p31 = scmp.lt.s32.totalorder %s30, 0
      %s32 = scalar_select %p31, %s30, 0
      %s33 = smul.u32 2, %s32
      %s35 = ssub.s32 256, 256
      %36 = vsyncadd [#allocation7], %s35
      %s37 = smul.addr %s33, 128
      %s38 = scalar_lea.hbm %s1, %s37
      %s39 = sshll.u32 [#allocation6], 4
      %s40 = int_to_ptr.vmem [resolvable:$true] %s39
      %45 = dma.hbm_to_vmem [thread:$0]  %s38, 256, %s40, [#allocation7], 128, 128, 8
    $region9: #{tpu_custom_call.1} parent=1 // pred_fallthru
      _
    // Predicated region
    $region10: #{tpu_custom_call.1} parent=1 // pred_check
      _
    $region11: #{tpu_custom_call.1} parent=1 // pred_check_branch
      %47 = sbr.rel (0) target = $region13
    $region12: #{tpu_custom_call.1} parent=1 // pred_region
      %48 = dma.done [#allocation4], 256
    $region13: #{tpu_custom_call.1} parent=1 // pred_fallthru
      _
    // Predicated region
    $region14: #{tpu_custom_call.1} parent=1 // pred_check
      _
    $region15: #{tpu_custom_call.1} parent=1 // pred_check_branch
      %50 = sbr.rel (0) target = $region17
    $region16: #{tpu_custom_call.1} parent=1 // pred_region
      %51 = dma.done [#allocation7], 256
    $region17: #{tpu_custom_call.1} parent=1 // pred_fallthru
      _
    %s52 = sadd.s32 0, 0
    %p53 = scmp.lt.s32.totalorder %s52, 0
    %s54 = scalar_select %p53, %s52, 0
    %s55 = smul.u32 2, %s54
    %s56 = sadd.s32 0, 0
    %p57 = scmp.lt.s32.totalorder %s56, 0
    %s58 = scalar_select %p57, %s56, 0
    %s59 = smul.u32 2, %s58
    %p60 = scmp.eq.s32.totalorder 0, 0
    // Predicated region
    $region18: #{tpu_custom_call.1} parent=1 // pred_check
      %p61 = pneg %p60
    $region19: #{tpu_custom_call.1} parent=1 // pred_check_branch
      %63 = sbr.rel (%p61) target = $region21
    $region20: #{tpu_custom_call.1} parent=1 // pred_region
      %64 = vst [vmem:[#allocation2] sm:$0xff] 0.0
    $region21: #{tpu_custom_call.1} parent=1 // pred_fallthru
      _
    %v65 = vld [vmem:[#allocation3] sm:$0xff]
    %v66 = vld [vmem:[#allocation3 + $0x8] sm:$0xff]
    %v67 = vld [vmem:[#allocation6] sm:$0xff]
    %v68 = vld [vmem:[#allocation6 + $0x8] sm:$0xff]
    %v69 = vmax.f32 %v65, 0.0
    %v70 = vmax.f32 %v66, 0.0
    %v71 = vmul.f32 %v65, %v67
    %v72 = vmul.f32 %v66, %v68
    %v73 = vsub.f32 %v69, %v71
    %v74 = vsub.f32 %v70, %v72
    %v75 = vand.u32 2147483647, %v65
    %v76 = vand.u32 2147483647, %v66
    %v77 = vsub.f32 0.0, %v75
    %v78 = vsub.f32 0.0, %v76
    %v79 = vmul.f32 %v77, 1.442695
    %v80 = vpow.pop %v79
    %v81 = vmul.f32 %v78, 1.442695
    %v82 = vpow.pop %v81
    %v83 = vadd.f32 %v80, 1.0
    %v84 = vlog2.pop %v83
    %v85 = vmul.f32 %v84, 0.6931472
    %v86 = vmul.f32 -0.5, %v80
    %v87 = vadd.f32 %v86, 1.0
    %v88 = vmul.f32 %v87, %v80
    %v89 = vand.u32 2147483647, %v80
    %vm90 = vcmp.lt.f32.partialorder %v89, 0.0004427343
    %v91 = vsel %vm90, %v88, %v85
    %v92 = vadd.f32 %v82, 1.0
    %v93 = vlog2.pop %v92
    %v94 = vmul.f32 %v93, 0.6931472
    %v95 = vmul.f32 -0.5, %v82
    %v96 = vadd.f32 %v95, 1.0
    %v97 = vmul.f32 %v96, %v82
    %v98 = vand.u32 2147483647, %v82
    %vm99 = vcmp.lt.f32.partialorder %v98, 0.0004427343
    %v100 = vsel %vm99, %v97, %v94
    %v101 = vadd.f32 %v73, %v91
    %v102 = vadd.f32 %v74, %v100
    %v103 = vsub.f32 0.0, %v101
    %v104 = vsub.f32 0.0, %v102
    %v105 = vmul.f32 %v103, 1.442695
    %v106 = vpow.pop %v105
    %v107 = vmul.f32 %v104, 1.442695
    %v108 = vpow.pop %v107
    %v109 = vsub.f32 1.0, %v106
    %v110 = vsub.f32 1.0, %v108
    %v111 = vmul.f32 %v109, %v109
    %v112 = vmul.f32 %v110, %v110
    %v113 = vmul.f32 %v111, %v101
    %v114 = vmul.f32 %v112, %v102
    %s115 = sadd.s32 0, 0
    %p116 = scmp.lt.s32.totalorder %s115, 1
    // Predicated region
    $region22: #{tpu_custom_call.1} parent=1 // pred_check
      %p117 = pneg %p116
    $region23: #{tpu_custom_call.1} parent=1 // pred_check_branch
      %119 = sbr.rel (%p117) target = $region25
    $region24: #{tpu_custom_call.1} parent=1 // pred_region
      %v120 = vld [vmem:[#allocation2] sm:$0xff]
      %v121 = vadd.f32 %v113, %v114
      %v122 = vadd.f32 %v120, %v121
      %123 = vst [vmem:[#allocation2] sm:$0xff] %v122
    $region25: #{tpu_custom_call.1} parent=1 // pred_fallthru
      _
    %p124 = scmp.ge.s32.totalorder %s115, 1
    // Predicated region
    $region26: #{tpu_custom_call.1} parent=1 // pred_check
      %p125 = pneg %p124
    $region27: #{tpu_custom_call.1} parent=1 // pred_check_branch
      %127 = sbr.rel (%p125) target = $region29
    $region28: #{tpu_custom_call.1} parent=1 // pred_region
      %v128 = vlaneseq
      %v129 = vshrl.u32 %v128, 7
      %v130 = vadd.s32 %v129, 8
      %s131 = smul.u32 %s115, 16
      %v132 = vstv %s131
      %v133 = vadd.s32 %v132, %v129
      %v134 = vadd.s32 %v132, %v130
      %vm135 = vcmp.lt.s32.totalorder %v133, 16
      %vm136 = vcmp.lt.s32.totalorder %v134, 16
      %v137 = vsel %vm135, %v113, 0.0
      %v138 = vsel %vm136, %v114, 0.0
      %v139 = vld [vmem:[#allocation2] sm:$0xff]
      %v140 = vadd.f32 %v137, %v138
      %v141 = vadd.f32 %v139, %v140
      %142 = vst [vmem:[#allocation2] sm:$0xff] %v141
    $region29: #{tpu_custom_call.1} parent=1 // pred_fallthru
      _
    // Predicated region
    $region30: #{tpu_custom_call.1} parent=1 // pred_check
      %p143 = pneg %p60
    $region31: #{tpu_custom_call.1} parent=1 // pred_check_branch
      %145 = sbr.rel (%p143) target = $region33
    $region32: #{tpu_custom_call.1} parent=1 // pred_region
      %v146 = vld [vmem:[#allocation2] sm:$0xff]
      %147 = vadd.xlane.f32.xlu0 %v146
      %v148 = vpop.xlane.xlu0 %147
      %v149 = vrot.slane %v148, 4
      %v150 = vadd.f32 %v148, %v149
      %v151 = vrot.slane %v150, 2
      %v152 = vadd.f32 %v150, %v151
      %v153 = vrot.slane %v152, 1
      %v154 = vadd.f32 %v152, %v153
      %s155 = vtos %v154
      %s156 = scalar_lea.smem [#allocation8], 0
      %157 = sst [smem:[%s156]] %s155
    $region33: #{tpu_custom_call.1} parent=1 // pred_fallthru
      _
    // Predicated region
    $region34: #{tpu_custom_call.1} parent=1 // pred_check
      _
    $region35: #{tpu_custom_call.1} parent=1 // pred_check_branch
      %159 = sbr.rel (0) target = $region37
    $region36: #{tpu_custom_call.1} parent=1 // pred_region
      %s161 = ssub.s32 16, 16
      %162 = vsyncadd [#allocation5], %s161
      %165 = dma.smem_to_hbm [#allocation8], 16, %s2, [#allocation5]
    $region37: #{tpu_custom_call.1} parent=1 // pred_fallthru
      _
    // Predicated region
    $region38: #{tpu_custom_call.1} parent=1 // pred_check
      _
    $region39: #{tpu_custom_call.1} parent=1 // pred_check_branch
      %167 = sbr.rel (0) target = $region41
    $region40: #{tpu_custom_call.1} parent=1 // pred_region
      %168 = dma.done [#allocation5], 16
    $region41: #{tpu_custom_call.1} parent=1 // pred_fallthru
      _
    %169 = sfence
    %170 = vsyncpa [#allocation4], 1
    %171 = vsyncpa [#allocation7], 1
    %172 = vsyncpa [#allocation5], 1

</llo_original>
